<compile_context>
chip_gen: v7x
topology: tpu7x:2x2x1
jax: 0.10.0
libtpu: 0.0.40
codegen_flags: <defaults>
</compile_context>

<pallas_src>
import functools

import jax
import jax.numpy as jnp
from jax import lax
from jax.experimental import pallas as pl
from jax.experimental.pallas import tpu as pltpu


# ---------------------------------------------------------------------------
# Kernel
# ---------------------------------------------------------------------------
def _dice_sums_kernel(lab_ref, prd_ref, *out_refs, threshold, d, td, denoised):
    """Grid = (n_rows // tn, cdiv(d, td)); axis 1 is the pixel reduction.

    The output refs double as accumulators: their index_map is constant
    along the reduction axis, so the blocks stay resident in VMEM and are
    written back to HBM only once, after the last reduction step.
      denoised=True : (intersect, pred_sum, label_sum)
      denoised=False: (intersect, union)
    """
    k = pl.program_id(1)

    @pl.when(k == 0)
    def _():
        for o in out_refs:
            o[...] = jnp.zeros_like(o)

    # Hot path: one compare, one f32 upcast, 2-3 lane reductions per tile.
    mask = prd_ref[...] > threshold
    l = lab_ref[...].astype(jnp.float32)

    # Ragged tail: the last tile may extend past the true row length `d`;
    # the overhang columns hold unspecified data, so mask them out.  For
    # non-last tiles (d - k*td) >= td, so the same code is an all-True mask
    # there; statically skipped entirely when D is tile-aligned.
    if d % td != 0:
        col = lax.broadcasted_iota(jnp.int32, l.shape, 1)
        ok = col < (d - k * td)
        mask = jnp.logical_and(mask, ok)
        l = jnp.where(ok, l, 0.0)

    p = mask.astype(jnp.float32)
    # intersect = sum(label where prediction fires) -- avoids a multiply.
    intersect = jnp.sum(jnp.where(mask, l, 0.0), axis=-1, keepdims=True)

    if denoised:
        isum_ref, psum_ref, lsum_ref = out_refs
        isum_ref[...] += intersect
        psum_ref[...] += jnp.sum(p, axis=-1, keepdims=True)
        lsum_ref[...] += jnp.sum(l, axis=-1, keepdims=True)
    else:
        isum_ref, usum_ref = out_refs
        isum_ref[...] += intersect
        usum_ref[...] += jnp.sum(p + l, axis=-1, keepdims=True)


# ---------------------------------------------------------------------------
# Tiling helpers
# ---------------------------------------------------------------------------
_FALLBACK_VMEM_CAPACITY = 64 * 1024 * 1024  # v7x per-TensorCore (most restrictive)


def _vmem_capacity_bytes():
    try:
        cap = getattr(pltpu.get_tpu_info(), "vmem_capacity_bytes", None)
        if cap:
            return int(cap)
    except Exception:
        pass
    return _FALLBACK_VMEM_CAPACITY


def _choose_subrow_split(n, d_total):
    """Split each row into r contiguous sub-rows (free reshape) so that
    (a) >= 8 sublanes per vreg are used even for tiny batches and
    (b) the batch grid axis has >= 2 blocks for v7x megacore."""
    r = 1
    while n * r < 16 and r < 16 and d_total % (2 * r) == 0:
        r *= 2
    return r


def _choose_tn(n_rows):
    """Largest multiple-of-8 divisor of n_rows that is <= 256 and leaves at
    least two batch blocks (megacore); otherwise the whole batch."""
    if n_rows >= 16 and n_rows % 8 == 0:
        start = (min(256, n_rows // 2) // 8) * 8
        for t in range(start, 7, -8):
            if n_rows % t == 0:
                return t
    return n_rows


def _choose_td(tn, d, itemsize_sum, input_budget):
    """Largest multiple-of-128 reduction tile whose double-buffered input
    tiles (2 pipeline buffers x (label + pred)) stay under input_budget.
    No padding / divisor search: the ragged tail is masked in-kernel."""
    max_td = (input_budget // (2 * tn * itemsize_sum)) // 128 * 128
    max_td = max(128, max_td)
    return d if d <= max_td else max_td


# ---------------------------------------------------------------------------
# Wrapper
# ---------------------------------------------------------------------------
def denoised_siim_dice(label, pred, *, threshold, iou=False, eps=1e-8,
                       denoised=False, mean=False, reduction_tile=None):
    """JAX/Pallas equivalent of the PyTorch denoised_siim_dice.forward.

    Inputs are NCHW with any numeric dtypes (prefer narrow dtypes -- e.g.
    bf16 pred / int8 label cast at the producer -- to cut HBM traffic; the
    kernel accumulates in f32 regardless).  `reduction_tile` is a test /
    tuning knob forcing the reduction tile (multiple of 128).
    """
    n = label.shape[0]
    # NOTE: the PyTorch module scales the noise threshold by the BATCH size
    # (label.shape[0]); reproduced exactly here.
    noise_th = 100.0 * (n / 128.0) ** 2

    label2d = label.reshape(n, -1)
    pred2d = pred.reshape(n, -1)
    assert label2d.shape == pred2d.shape
    d_total = pred2d.shape[1]

    # Free (bitcast) reshape (n, D) -> (n*r, D/r); per-row sums are recovered
    # by summing the r sub-row partials after the kernel.
    r = _choose_subrow_split(n, d_total)
    n_rows = n * r
    d = d_total // r
    if r > 1:
        label2d = label2d.reshape(n_rows, d)
        pred2d = pred2d.reshape(n_rows, d)

    itemsize_sum = label2d.dtype.itemsize + pred2d.dtype.itemsize
    vmem_cap = _vmem_capacity_bytes()
    input_budget = min(int(vmem_cap * 0.40), 48 * 1024 * 1024)
    vmem_limit = min(int(vmem_cap * 0.70), 96 * 1024 * 1024)

    tn = _choose_tn(n_rows)
    td = _choose_td(tn, d, itemsize_sum, input_budget)
    if reduction_tile is not None and d > reduction_tile:
        assert reduction_tile % 128 == 0
        td = reduction_tile

    n_out = 3 if denoised else 2
    kernel = functools.partial(
        _dice_sums_kernel, threshold=float(threshold), d=d, td=td,
        denoised=bool(denoised))

    cost = pl.CostEstimate(
        flops=5 * n * d_total,
        transcendentals=0,
        bytes_accessed=n * d_total * itemsize_sum + n_rows * n_out * 4)

    out = pl.pallas_call(
        kernel,
        out_shape=tuple(jax.ShapeDtypeStruct((n_rows, 1), jnp.float32)
                        for _ in range(n_out)),
        grid_spec=pltpu.PrefetchScalarGridSpec(
            num_scalar_prefetch=0,
            grid=(n_rows // tn, pl.cdiv(d, td)),
            in_specs=[
                pl.BlockSpec((tn, td), lambda i, k: (i, k)),
                pl.BlockSpec((tn, td), lambda i, k: (i, k)),
            ],
            out_specs=tuple(pl.BlockSpec((tn, 1), lambda i, k: (i, 0))
                            for _ in range(n_out)),
        ),
        compiler_params=pltpu.CompilerParams(
            dimension_semantics=("parallel", "arbitrary"),
            vmem_limit_bytes=vmem_limit),
        cost_estimate=cost,
    )(label2d, pred2d)

    # Tiny finalize on (n,)-sized vectors in plain JAX.
    def combine(x):  # (n_rows, 1) sub-row partials -> (n,) per original row
        return x.reshape(n, r).sum(axis=1)

    intersect = combine(out[0])
    if denoised:
        psum = combine(out[1])
        lsum = combine(out[2])
        noisy = psum < noise_th
        # Zeroing a "noisy" predicted row == zeroing its intersect and its
        # contribution to the union.
        intersect = jnp.where(noisy, 0.0, intersect)
        psum = jnp.where(noisy, 0.0, psum)
        union = psum + lsum
    else:
        union = combine(out[1])

    if iou:
        res = (intersect + eps) / (union - intersect + eps)
    else:
        res = (2.0 * intersect + eps) / (union + eps)
    return jnp.mean(res) if mean else res


# ---------------------------------------------------------------------------
# Pure-JAX reference (mirror of the PyTorch forward)
# ---------------------------------------------------------------------------
def _reference(label, pred, *, threshold, iou=False, eps=1e-8,
               denoised=False, mean=False):
    n = label.shape[0]
    noise_th = 100.0 * (n / 128.0) ** 2
    p = (pred.reshape(n, -1) > threshold).astype(jnp.float32)
    if denoised:
        p = jnp.where((p.sum(-1) < noise_th)[:, None], 0.0, p)
    l = label.reshape(n, -1).astype(jnp.float32)
    intersect = (p * l).sum(-1)
    union = (p + l).sum(-1)
    if not iou:
        res = (2.0 * intersect + eps) / (union + eps)
    else:
        res = (intersect + eps) / (union - intersect + eps)
    return res.mean() if mean else res


if __name__ == "__main__":
    key = jax.random.PRNGKey(0)
    ok = True

    test_cases = [
        # (shape, pred_dtype, label_dtype, reduction_tile)
        ((2, 4, 16, 16), jnp.float32, jnp.float32, None),   # sub-row split r=8
        ((2, 3, 10, 10), jnp.float32, jnp.float32, None),   # non-128-aligned D
        ((2, 1, 9, 9),   jnp.float32, jnp.float32, None),   # odd D, tiny batch
        ((4, 1, 40, 50), jnp.float32, jnp.float32, 256),    # multi-step + ragged tail mask
        ((2, 4, 16, 16), jnp.bfloat16, jnp.int8,   None),   # narrow-dtype inputs
    ]

    for shape, pdt, ldt, rt in test_cases:
        key, k1, k2 = jax.random.split(key, 3)
        pred = jax.random.uniform(k1, shape, dtype=jnp.float32).astype(pdt)
        label = (jax.random.uniform(k2, shape, dtype=jnp.float32) > 0.5
                 ).astype(ldt)
        for denoised in (False, True):
            for iou in (False, True):
                for mean in (False, True):
                    out = denoised_siim_dice(label, pred, threshold=0.5,
                                             iou=iou, denoised=denoised,
                                             mean=mean, reduction_tile=rt)
                    out = jax.block_until_ready(out)
                    ref = _reference(label, pred, threshold=0.5, iou=iou,
                                     denoised=denoised, mean=mean)
                    if not jnp.allclose(out, ref, rtol=1e-5, atol=1e-5):
                        ok = False

    # Case where the denoise branch actually fires: n=16 -> noise_th = 1.5625;
    # row 0 has exactly one pixel above threshold, so it gets zeroed.
    key, k1, k2 = jax.random.split(key, 3)
    shape = (16, 1, 8, 16)
    pred = jax.random.uniform(k1, shape, dtype=jnp.float32)
    pred = pred.at[0].set(0.1).at[0, 0, 0, 0].set(0.9)
    label = (jax.random.uniform(k2, shape, dtype=jnp.float32) > 0.5
             ).astype(jnp.float32)
    for denoised in (False, True):
        for iou in (False, True):
            out = denoised_siim_dice(label, pred, threshold=0.5, iou=iou,
                                     denoised=denoised, mean=False)
            out = jax.block_until_ready(out)
            ref = _reference(label, pred, threshold=0.5, iou=iou,
                             denoised=denoised, mean=False)
            if not jnp.allclose(out, ref, rtol=1e-5, atol=1e-5):
                ok = False

    print("KERNEL_OK" if ok else "KERNEL_MISMATCH")
</pallas_src>

<mosaic_0001>
module attributes {stable_mosaic.version = 11 : i64} {
  func.func @_dice_sums_kernel(%arg0: i32, %arg1: i32, %arg2: memref<8x128xf32, #tpu.memory_space<vmem>>, %arg3: memref<8x128xf32, #tpu.memory_space<vmem>>, %arg4: memref<8x1xf32, #tpu.memory_space<vmem>>, %arg5: memref<8x1xf32, #tpu.memory_space<vmem>>) attributes {dimension_semantics = [#tpu.dimension_semantics<parallel>, #tpu.dimension_semantics<arbitrary>], iteration_bounds = array<i64: 2, 1>, scalar_prefetch = 0 : i64, scratch_operands = 0 : i64, tpu.core_type = #tpu.core_type<tc>, window_params = [{transform_indices = @transform_0, window_bounds = array<i64: 8, 128>}, {transform_indices = @transform_1, window_bounds = array<i64: 8, 128>}, {transform_indices = @transform_2, window_bounds = array<i64: 8, 1>}, {transform_indices = @transform_3, window_bounds = array<i64: 8, 1>}]} {
    %c0_i32 = arith.constant 0 : i32
    %0 = arith.cmpi eq, %arg1, %c0_i32 : i32
    %1 = arith.extui %0 : i1 to i32
    %c0_i32_0 = arith.constant 0 : i32
    %2 = arith.cmpi ne, %1, %c0_i32_0 : i32
    scf.if %2 {
      %cst_15 = arith.constant 0.000000e+00 : f32
      %22 = vector.broadcast %cst_15 : f32 to vector<8x1xf32>
      %c0_16 = arith.constant 0 : index
      %c0_17 = arith.constant 0 : index
      %23 = vector.load %arg4[%c0_16, %c0_17] : memref<8x1xf32, #tpu.memory_space<vmem>>, vector<8x1xf32>
      tpu.vector_store %arg4[%c0_16, %c0_17], %22 {strides = array<i32>} : memref<8x1xf32, #tpu.memory_space<vmem>>, vector<8x1xf32>,
      %cst_18 = arith.constant 0.000000e+00 : f32
      %24 = vector.broadcast %cst_18 : f32 to vector<8x1xf32>
      %c0_19 = arith.constant 0 : index
      %c0_20 = arith.constant 0 : index
      %25 = vector.load %arg5[%c0_19, %c0_20] : memref<8x1xf32, #tpu.memory_space<vmem>>, vector<8x1xf32>
      tpu.vector_store %arg5[%c0_19, %c0_20], %24 {strides = array<i32>} : memref<8x1xf32, #tpu.memory_space<vmem>>, vector<8x1xf32>,
    } else {
    }
    %c0 = arith.constant 0 : index
    %c0_1 = arith.constant 0 : index
    %3 = vector.load %arg3[%c0, %c0_1] : memref<8x128xf32, #tpu.memory_space<vmem>>, vector<8x128xf32>
    %cst = arith.constant 5.000000e-01 : f32
    %4 = vector.broadcast %cst : f32 to vector<8x128xf32>
    %5 = arith.cmpf ogt, %3, %4 : vector<8x128xf32>
    %c0_2 = arith.constant 0 : index
    %c0_3 = arith.constant 0 : index
    %6 = vector.load %arg2[%c0_2, %c0_3] : memref<8x128xf32, #tpu.memory_space<vmem>>, vector<8x128xf32>
    %7 = arith.extui %5 : vector<8x128xi1> to vector<8x128xi32>
    %8 = arith.sitofp %7 : vector<8x128xi32> to vector<8x128xf32>
    %cst_4 = arith.constant 0.000000e+00 : f32
    %9 = vector.broadcast %cst_4 : f32 to vector<8x128xf32>
    %10 = arith.select %5, %6, %9 : vector<8x128xi1>, vector<8x128xf32>
    %cst_5 = arith.constant dense<0.000000e+00> : vector<8xf32>
    %11 = vector.multi_reduction <add>, %10, %cst_5 [1] : vector<8x128xf32> to vector<8xf32>
    %12 = vector.shape_cast %11 : vector<8xf32> to vector<8x1xf32>
    %c0_6 = arith.constant 0 : index
    %c0_7 = arith.constant 0 : index
    %13 = vector.load %arg4[%c0_6, %c0_7] : memref<8x1xf32, #tpu.memory_space<vmem>>, vector<8x1xf32>
    %14 = arith.addf %13, %12 : vector<8x1xf32>
    %c0_8 = arith.constant 0 : index
    %c0_9 = arith.constant 0 : index
    %15 = vector.load %arg4[%c0_8, %c0_9] : memref<8x1xf32, #tpu.memory_space<vmem>>, vector<8x1xf32>
    tpu.vector_store %arg4[%c0_8, %c0_9], %14 {strides = array<i32>} : memref<8x1xf32, #tpu.memory_space<vmem>>, vector<8x1xf32>,
    %c0_10 = arith.constant 0 : index
    %c0_11 = arith.constant 0 : index
    %16 = vector.load %arg5[%c0_10, %c0_11] : memref<8x1xf32, #tpu.memory_space<vmem>>, vector<8x1xf32>
    %17 = arith.addf %8, %6 : vector<8x128xf32>
    %cst_12 = arith.constant dense<0.000000e+00> : vector<8xf32>
    %18 = vector.multi_reduction <add>, %17, %cst_12 [1] : vector<8x128xf32> to vector<8xf32>
    %19 = vector.shape_cast %18 : vector<8xf32> to vector<8x1xf32>
    %20 = arith.addf %16, %19 : vector<8x1xf32>
    %c0_13 = arith.constant 0 : index
    %c0_14 = arith.constant 0 : index
    %21 = vector.load %arg5[%c0_13, %c0_14] : memref<8x1xf32, #tpu.memory_space<vmem>>, vector<8x1xf32>
    tpu.vector_store %arg5[%c0_13, %c0_14], %20 {strides = array<i32>} : memref<8x1xf32, #tpu.memory_space<vmem>>, vector<8x1xf32>,
    return
  }
  func.func @transform_0(%arg0: i32, %arg1: i32) -> (i32, i32) {
    %c0_i32 = arith.constant 0 : i32
    return %arg0, %arg1 : i32, i32
  }
  func.func @transform_1(%arg0: i32, %arg1: i32) -> (i32, i32) {
    %c0_i32 = arith.constant 0 : i32
    return %arg0, %arg1 : i32, i32
  }
  func.func @transform_2(%arg0: i32, %arg1: i32) -> (i32, i32) {
    %c0_i32 = arith.constant 0 : i32
    %c0_i32_0 = arith.constant 0 : i32
    return %arg0, %c0_i32 : i32, i32
  }
  func.func @transform_3(%arg0: i32, %arg1: i32) -> (i32, i32) {
    %c0_i32 = arith.constant 0 : i32
    %c0_i32_0 = arith.constant 0 : i32
    return %arg0, %c0_i32 : i32, i32
  }
}

</mosaic_0001>

<llo_original>
// kernel: tpu_custom_call.1
$region0: #{tpu_custom_call.1}
  #allocation0 [shape = 'u32[]', space=smem, size = 0x4, offset = 0x4, fixed_abs, tag = 'smem constant byte address 0x4 - core index']
  #allocation1 [shape = 'u32[144,128]{1,0:T(1,128)}', space=vmem, size = 0x12000, scoped, tag = 'internal scratch']
  %s0 = inlined_call_operand.hbm [shape: f32[16,128], index: 0, kind: input, shape index: {}]
  %s1 = inlined_call_operand.hbm [shape: f32[16,128], index: 1, kind: input, shape index: {}]
  %s2 = inlined_call_operand.vmem [shape: f32[16,1], index: 2, kind: output, shape index: {0}]
  %s3 = inlined_call_operand.vmem [shape: f32[16,1], index: 3, kind: output, shape index: {1}]
  %4 = xla_tuple %s2, %s3
  %s5 = sld [smem:[#allocation0]]
  $region61: #{tpu_custom_call.1} parent=0
    _
  %s7 = ssub.s32 1, %s5
  %s8 = scalar_select 0, %s7, %s5
  $region1: #{tpu_custom_call.1} parent=0
    #allocation2 [shape = 'u8[8192]{0}', space=vmem, size = 0x2000, scoped, tag = 'input window, operand 0']
    #allocation3 [shape = 's32[2]{0}', space=sflag, size = 0x8, scoped, tag = 'scoped memory for tpu_custom_call.1']
    #allocation4 [shape = 'u8[8192]{0}', space=vmem, size = 0x2000, scoped, tag = 'input window, operand 1']
    #allocation5 [shape = 's32[2]{0}', space=sflag, size = 0x8, scoped, tag = 'scoped memory for tpu_custom_call.1']
    %9 = vsyncpa [#allocation3], 0
    %s10 = scalar_lea.sflag [#allocation3], 1
    %11 = vsyncpa %s10, 0
    %12 = vsyncpa [#allocation5], 0
    %s13 = scalar_lea.sflag [#allocation5], 1
    %14 = vsyncpa %s13, 0
    loop: start=0, step=1, limit=4
    $region2: #{tpu_custom_call.1} parent=1 // loop_pre_header
      _
    $region3: #{tpu_custom_call.1} parent=1 // loop_header
      %s16 = sphi 0, %s20
      %p17 = scmp.ge.s32.totalorder %s16, 4
      %s23 = sphi 0, %s35
      %s24 = sphi 0, %s31
      %s25 = sphi 0, %s23
      %s26 = sphi 0, %s24
      %s27 = sphi 0, %s25
      %s28 = sphi 0, %s26
      %s40 = sphi 0, %s42
      %s43 = sphi 0, %s40
      %s44 = sphi 0, %s43
      %s60 = sphi 0, %s44
      %s68 = sphi 0, %s70
      %s71 = sphi 0, %s68
      %s72 = sphi 0, %s71
      %s88 = sphi 0, %s72
      %s94 = sphi 0, %s96
      %s97 = sphi 0, %s94
      %s98 = sphi 0, %s97
      %s114 = sphi 0, %s98
      %s120 = sphi 0, %s122
      %s123 = sphi 0, %s120
      %s124 = sphi 0, %s123
      %s140 = sphi 0, %s124
    $region4: #{tpu_custom_call.1} parent=1 // loop_header_branch
      %19 = sbr.rel (%p17) target = $region8
    $region5: #{tpu_custom_call.1} parent=1 // loop_body
      %s21 = ssub.s32 %s16, 1
      %s22 = ssub.s32 %s16, 2
      %s29 = sadd.s32 1, %s24
      %p30 = scmp.ge.s32.totalorder %s29, 1
      %s31 = scalar_select %p30, 0, %s29
      %s32 = sadd.s32 1, %s23
      %s33 = scalar_select %p30, %s32, %s23
      %p34 = scmp.ge.s32.totalorder %s33, 2
      %s35 = scalar_select %p34, 0, %s33
      %s36 = ssub.s32 %s23, %s35
      %s37 = ssub.s32 %s24, %s31
      %s38 = sor.u32 %s36, %s37
      %p39 = scmp.eq.s32.totalorder %s38, 0
      %s41 = sadd.s32 %s40, 1
      %s42 = scalar_select %p39, %s40, %s41
      %p45 = pneg %p39
      %p46 = scmp.eq.s32.totalorder %s16, 1
      %p47 = por %p45, %p46
      %p48 = scmp.ne.s32.totalorder %s40, %s43
      %p49 = scmp.eq.s32.totalorder %s16, 0
      %p50 = por %p48, %p49
      %p51 = scmp.ne.s32.totalorder %s40, %s43
      %p52 = scmp.eq.s32.totalorder %s21, 1
      %p53 = por %p51, %p52
      %p54 = scmp.ne.s32.totalorder %s43, %s44
      %p55 = scmp.eq.s32.totalorder %s21, 0
      %p56 = por %p54, %p55
      %p57 = scmp.ne.s32.totalorder %s43, %s44
      %p58 = scmp.eq.s32.totalorder %s22, 1
      %p59 = por %p57, %p58
      %p61 = scmp.ne.s32.totalorder %s44, %s60
      %p62 = scmp.eq.s32.totalorder %s22, 0
      %p63 = por %p61, %p62
      %s64 = ssub.s32 %s23, %s35
      %s65 = ssub.s32 %s24, %s31
      %s66 = sor.u32 %s64, %s65
      %p67 = scmp.eq.s32.totalorder %s66, 0
      %s69 = sadd.s32 %s68, 1
      %s70 = scalar_select %p67, %s68, %s69
      %p73 = pneg %p67
      %p74 = scmp.eq.s32.totalorder %s16, 1
      %p75 = por %p73, %p74
      %p76 = scmp.ne.s32.totalorder %s68, %s71
      %p77 = scmp.eq.s32.totalorder %s16, 0
      %p78 = por %p76, %p77
      %p79 = scmp.ne.s32.totalorder %s68, %s71
      %p80 = scmp.eq.s32.totalorder %s21, 1
      %p81 = por %p79, %p80
      %p82 = scmp.ne.s32.totalorder %s71, %s72
      %p83 = scmp.eq.s32.totalorder %s21, 0
      %p84 = por %p82, %p83
      %p85 = scmp.ne.s32.totalorder %s71, %s72
      %p86 = scmp.eq.s32.totalorder %s22, 1
      %p87 = por %p85, %p86
      %p89 = scmp.ne.s32.totalorder %s72, %s88
      %p90 = scmp.eq.s32.totalorder %s22, 0
      %p91 = por %p89, %p90
      %s92 = ssub.s32 %s23, %s35
      %p93 = scmp.eq.s32.totalorder %s92, 0
      %s95 = sadd.s32 %s94, 1
      %s96 = scalar_select %p93, %s94, %s95
      %p99 = pneg %p93
      %p100 = scmp.eq.s32.totalorder %s16, 1
      %p101 = por %p99, %p100
      %p102 = scmp.ne.s32.totalorder %s94, %s97
      %p103 = scmp.eq.s32.totalorder %s16, 0
      %p104 = por %p102, %p103
      %p105 = scmp.ne.s32.totalorder %s94, %s97
      %p106 = scmp.eq.s32.totalorder %s21, 1
      %p107 = por %p105, %p106
      %p108 = scmp.ne.s32.totalorder %s97, %s98
      %p109 = scmp.eq.s32.totalorder %s21, 0
      %p110 = por %p108, %p109
      %p111 = scmp.ne.s32.totalorder %s97, %s98
      %p112 = scmp.eq.s32.totalorder %s22, 1
      %p113 = por %p111, %p112
      %p115 = scmp.ne.s32.totalorder %s98, %s114
      %p116 = scmp.eq.s32.totalorder %s22, 0
      %p117 = por %p115, %p116
      %s118 = ssub.s32 %s23, %s35
      %p119 = scmp.eq.s32.totalorder %s118, 0
      %s121 = sadd.s32 %s120, 1
      %s122 = scalar_select %p119, %s120, %s121
      %p125 = pneg %p119
      %p126 = scmp.eq.s32.totalorder %s16, 1
      %p127 = por %p125, %p126
      %p128 = scmp.ne.s32.totalorder %s120, %s123
      %p129 = scmp.eq.s32.totalorder %s16, 0
      %p130 = por %p128, %p129
      %p131 = scmp.ne.s32.totalorder %s120, %s123
      %p132 = scmp.eq.s32.totalorder %s21, 1
      %p133 = por %p131, %p132
      %p134 = scmp.ne.s32.totalorder %s123, %s124
      %p135 = scmp.eq.s32.totalorder %s21, 0
      %p136 = por %p134, %p135
      %p137 = scmp.ne.s32.totalorder %s123, %s124
      %p138 = scmp.eq.s32.totalorder %s22, 1
      %p139 = por %p137, %p138
      %p141 = scmp.ne.s32.totalorder %s124, %s140
      %p142 = scmp.eq.s32.totalorder %s22, 0
      %p143 = por %p141, %p142
      %p144 = scmp.le.s32.totalorder 1, %s16
      %p145 = scmp.lt.s32.totalorder %s16, 3
      %p146 = pnand %p144, %p145
      %p147 = pneg %p146
      // Predicated region
      $region9: #{tpu_custom_call.1} parent=5 // pred_check
        _
      $region10: #{tpu_custom_call.1} parent=5 // pred_check_branch
        %149 = sbr.rel (%p146) target = $region12
      $region11: #{tpu_custom_call.1} parent=5 // pred_region
        %s150 = ssub.s32 %s16, 1
      $region12: #{tpu_custom_call.1} parent=5 // pred_fallthru
        _
      %p151 = scmp.lt.s32.totalorder %s16, 2
      // Predicated region
      $region13: #{tpu_custom_call.1} parent=5 // pred_check
        %p152 = pneg %p151
      $region14: #{tpu_custom_call.1} parent=5 // pred_check_branch
        %154 = sbr.rel (%p152) target = $region16
      $region15: #{tpu_custom_call.1} parent=5 // pred_region
        // Predicated region
        $region17: #{tpu_custom_call.1} parent=15 // pred_check
          %p155 = pneg %p50
        $region18: #{tpu_custom_call.1} parent=15 // pred_check_branch
          %157 = sbr.rel (%p155) target = $region20
        $region19: #{tpu_custom_call.1} parent=15 // pred_region
          %s158 = sand.u32 %s40, 1
          %s159 = scalar_lea.sflag [#allocation3], %s158
          %s160 = sand.u32 %s40, 1
          %s161 = smul.addr %s160, 8
          %s162 = scalar_lea.vmem [#allocation2], %s161
          %s164 = ssub.s32 128, 128
          %165 = vsyncadd %s159, %s164
          %s166 = sadd.s32 %s24, %s23
          %s167 = smul.addr %s166, 128
          %s168 = scalar_lea.hbm %s0, %s167
          %s170 = sshll.u32 %s162, 4
          %s171 = int_to_ptr.vmem [resolvable:$true] %s170
          %173 = dma.hbm_to_vmem [thread:$0]  %s168, 128, %s171, %s159
        $region20: #{tpu_custom_call.1} parent=15 // pred_fallthru
          _
        // Predicated region
        $region21: #{tpu_custom_call.1} parent=15 // pred_check
          %p174 = pneg %p78
        $region22: #{tpu_custom_call.1} parent=15 // pred_check_branch
          %176 = sbr.rel (%p174) target = $region24
        $region23: #{tpu_custom_call.1} parent=15 // pred_region
          %s177 = sand.u32 %s68, 1
          %s178 = scalar_lea.sflag [#allocation5], %s177
          %s179 = sand.u32 %s68, 1
          %s180 = smul.addr %s179, 8
          %s181 = scalar_lea.vmem [#allocation4], %s180
          %s183 = ssub.s32 128, 128
          %184 = vsyncadd %s178, %s183
          %s185 = sadd.s32 %s24, %s23
          %s186 = smul.addr %s185, 128
          %s187 = scalar_lea.hbm %s1, %s186
          %s189 = sshll.u32 %s181, 4
          %s190 = int_to_ptr.vmem [resolvable:$true] %s189
          %192 = dma.hbm_to_vmem [thread:$0]  %s187, 128, %s190, %s178
        $region24: #{tpu_custom_call.1} parent=15 // pred_fallthru
          _
      $region16: #{tpu_custom_call.1} parent=5 // pred_fallthru
        _
      %p193 = scmp.le.s32.totalorder 1, %s16
      %p194 = scmp.lt.s32.totalorder %s16, 3
      %p195 = pnand %p193, %p194
      %p196 = pneg %p195
      // Predicated region
      $region25: #{tpu_custom_call.1} parent=5 // pred_check
        _
      $region26: #{tpu_custom_call.1} parent=5 // pred_check_branch
        %198 = sbr.rel (%p195) target = $region28
      $region27: #{tpu_custom_call.1} parent=5 // pred_region
        %s199 = ssub.s32 %s16, 1
        %s200 = sand.u32 %s43, 1
        %s201 = scalar_lea.sflag [#allocation3], %s200
        %s202 = sand.u32 %s43, 1
        %s203 = smul.addr %s202, 8
        %s204 = scalar_lea.vmem [#allocation2], %s203
        // Predicated region
        $region29: #{tpu_custom_call.1} parent=27 // pred_check
          %p205 = pneg %p56
        $region30: #{tpu_custom_call.1} parent=27 // pred_check_branch
          %207 = sbr.rel (%p205) target = $region32
        $region31: #{tpu_custom_call.1} parent=27 // pred_region
          %208 = dma.done %s201, 128
        $region32: #{tpu_custom_call.1} parent=27 // pred_fallthru
          _
        %s209 = sand.u32 %s71, 1
        %s210 = scalar_lea.sflag [#allocation5], %s209
        %s211 = sand.u32 %s71, 1
        %s212 = smul.addr %s211, 8
        %s213 = scalar_lea.vmem [#allocation4], %s212
        // Predicated region
        $region33: #{tpu_custom_call.1} parent=27 // pred_check
          %p214 = pneg %p84
        $region34: #{tpu_custom_call.1} parent=27 // pred_check_branch
          %216 = sbr.rel (%p214) target = $region36
        $region35: #{tpu_custom_call.1} parent=27 // pred_region
          %217 = dma.done %s210, 128
        $region36: #{tpu_custom_call.1} parent=27 // pred_fallthru
          _
        %s218 = sand.u32 %s43, 1
        %s219 = scalar_lea.sflag [#allocation3], %s218
        %s220 = sand.u32 %s43, 1
        %s221 = smul.addr %s220, 8
        %s222 = scalar_lea.vmem [#allocation2], %s221
        %p223 = pneg %p56
        %p224 = pneg %p53
        %s225 = sand.u32 %s71, 1
        %s226 = scalar_lea.sflag [#allocation5], %s225
        %s227 = sand.u32 %s71, 1
        %s228 = smul.addr %s227, 8
        %s229 = scalar_lea.vmem [#allocation4], %s228
        %p230 = pneg %p84
        %p231 = pneg %p81
        %p232 = pneg %p110
        %p233 = pneg %p107
        %p234 = scmp.lt.s32.totalorder %s25, 1
        %s235 = scalar_select %p234, %s25, 1
        %s236 = smul.addr %s235, 8
        %s237 = scalar_lea.vmem %s2, %s236
        %p238 = pneg %p136
        %p239 = pneg %p133
        %p240 = scmp.lt.s32.totalorder %s25, 1
        %s241 = scalar_select %p240, %s25, 1
        %s242 = smul.addr %s241, 8
        %s243 = scalar_lea.vmem %s3, %s242
        %p244 = scmp.lt.s32.totalorder %s25, 1
        %s245 = scalar_select %p244, %s25, 1
        %s246 = smul.addr %s245, 8
        %s247 = scalar_lea.vmem %s2, %s246
        %p248 = scmp.lt.s32.totalorder %s25, 1
        %s249 = scalar_select %p248, %s25, 1
        %s250 = smul.addr %s249, 8
        %s251 = scalar_lea.vmem %s3, %s250
        %p252 = scmp.eq.s32.totalorder %s26, 0
        // Predicated region
        $region37: #{tpu_custom_call.1} parent=27 // pred_check
          %p253 = pneg %p252
        $region38: #{tpu_custom_call.1} parent=27 // pred_check_branch
          %255 = sbr.rel (%p253) target = $region40
        $region39: #{tpu_custom_call.1} parent=27 // pred_region
          %vm256 = vcmask 7168
          %257 = vst.msk [vmem:[%s247] sm:$0xff] %vm256, 0.0
          %258 = vst.msk [vmem:[%s251] sm:$0xff] %vm256, 0.0
        $region40: #{tpu_custom_call.1} parent=27 // pred_fallthru
          _
        %v259 = vld [vmem:[%s213] sm:$0xff]
        %vm260 = vcmp.gt.f32.partialorder %v259, 0.5
        %v261 = vld [vmem:[%s204] sm:$0xff]
        %v262 = vsel %vm260, 1, 0
        %v263 = vcvt.s32.f32 %v262
        %v264 = vsel %vm260, %v261, 0.0
        %265 = vadd.xlane.f32.xlu0 %v264
        %v266 = vpop.xlane.xlu0 %265
        %v267 = vld [vmem:[%s247] sm:$0xff]
        %v268 = vadd.f32 %v267, %v266
        %vm269 = vcmask 7168
        %270 = vst.msk [vmem:[%s247] sm:$0xff] %vm269, %v268
        %v271 = vld [vmem:[%s251] sm:$0xff]
        %v272 = vadd.f32 %v263, %v261
        %273 = vadd.xlane.f32.xlu0 %v272
        %v274 = vpop.xlane.xlu0 %273
        %v275 = vadd.f32 %v271, %v274
        %276 = vst.msk [vmem:[%s251] sm:$0xff] %vm269, %v275
        %p277 = scmp.lt.s32.totalorder %s25, 1
        %s278 = scalar_select %p277, %s25, 1
        %s279 = smul.addr %s278, 8
        %s280 = scalar_lea.vmem %s2, %s279
        %p281 = scmp.lt.s32.totalorder %s25, 1
        %s282 = scalar_select %p281, %s25, 1
        %s283 = smul.addr %s282, 8
        %s284 = scalar_lea.vmem %s3, %s283
        // Predicated region
        $region41: #{tpu_custom_call.1} parent=27 // pred_check
          %p285 = pneg %p107
        $region42: #{tpu_custom_call.1} parent=27 // pred_check_branch
          %287 = sbr.rel (%p285) target = $region44
        $region43: #{tpu_custom_call.1} parent=27 // pred_region
          _
        $region44: #{tpu_custom_call.1} parent=27 // pred_fallthru
          _
        // Predicated region
        $region45: #{tpu_custom_call.1} parent=27 // pred_check
          %p288 = pneg %p133
        $region46: #{tpu_custom_call.1} parent=27 // pred_check_branch
          %290 = sbr.rel (%p288) target = $region48
        $region47: #{tpu_custom_call.1} parent=27 // pred_region
          _
        $region48: #{tpu_custom_call.1} parent=27 // pred_fallthru
          _
      $region28: #{tpu_custom_call.1} parent=5 // pred_fallthru
        _
      %p291 = scmp.le.s32.totalorder 2, %s16
      // Predicated region
      $region49: #{tpu_custom_call.1} parent=5 // pred_check
        %p292 = pneg %p291
      $region50: #{tpu_custom_call.1} parent=5 // pred_check_branch
        %294 = sbr.rel (%p292) target = $region52
      $region51: #{tpu_custom_call.1} parent=5 // pred_region
        %s295 = ssub.s32 %s16, 2
        // Predicated region
        $region53: #{tpu_custom_call.1} parent=51 // pred_check
          %p296 = pneg %p113
        $region54: #{tpu_custom_call.1} parent=51 // pred_check_branch
          %298 = sbr.rel (%p296) target = $region56
        $region55: #{tpu_custom_call.1} parent=51 // pred_region
          %p299 = scmp.lt.s32.totalorder %s27, 1
          %s300 = scalar_select %p299, %s27, 1
          %s301 = smul.addr %s300, 8
          %s302 = scalar_lea.vmem %s2, %s301
        $region56: #{tpu_custom_call.1} parent=51 // pred_fallthru
          _
        // Predicated region
        $region57: #{tpu_custom_call.1} parent=51 // pred_check
          %p303 = pneg %p139
        $region58: #{tpu_custom_call.1} parent=51 // pred_check_branch
          %305 = sbr.rel (%p303) target = $region60
        $region59: #{tpu_custom_call.1} parent=51 // pred_region
          %p306 = scmp.lt.s32.totalorder %s27, 1
          %s307 = scalar_select %p306, %s27, 1
          %s308 = smul.addr %s307, 8
          %s309 = scalar_lea.vmem %s3, %s308
        $region60: #{tpu_custom_call.1} parent=51 // pred_fallthru
          _
      $region52: #{tpu_custom_call.1} parent=5 // pred_fallthru
        _
    $region6: #{tpu_custom_call.1} parent=1 // loop_footer
      %s20 = sadd.s32 1, %s16
    $region7: #{tpu_custom_call.1} parent=1 // loop_footer_branch
      %15 = sbr.rel target = $region3
    $region8: #{tpu_custom_call.1} parent=1 // loop_exit
      _
    %310 = vsyncpa [#allocation3], 1
    %s311 = scalar_lea.sflag [#allocation3], 1
    %312 = vsyncpa %s311, 1
    %313 = vsyncpa [#allocation5], 1
    %s314 = scalar_lea.sflag [#allocation5], 1
    %315 = vsyncpa %s314, 1

</llo_original>
